<compile_context>
chip_gen: v6e
topology: v6e:2x2x1
jax: 0.10.0
libtpu: 0.0.40
codegen_flags: <defaults>
</compile_context>

<pallas_src>
import jax
import jax.numpy as jnp
from jax.experimental import pallas as pl
from jax.experimental.pallas import tpu as pltpu

EPS = 1e-5


def _layernorm_kernel(x_ref, g_ref, b_ref, o_ref):
    # x_ref: (R, D) in VMEM; g_ref/b_ref: (1, D) gamma / beta.
    x = x_ref[...].astype(jnp.float32)
    d = x.shape[-1]
    inv_d = 1.0 / float(d)  # compile-time constant: multiply, never divide

    # Two-pass statistics (matches PyTorch LayerNorm numerics; no
    # catastrophic cancellation for inputs with large means).
    mean = jnp.sum(x, axis=-1, keepdims=True) * inv_d
    xc = x - mean
    var = jnp.sum(xc * xc, axis=-1, keepdims=True) * inv_d

    inv = jax.lax.rsqrt(var + EPS)  # EUP slot, effectively free

    gamma = g_ref[...].astype(jnp.float32)  # (1, D) broadcasts over rows
    beta = b_ref[...].astype(jnp.float32)
    o_ref[...] = (xc * inv * gamma + beta).astype(o_ref.dtype)


@jax.jit
def layernorm_pallas(x, gamma, beta):
    """LayerNorm over the last dim of x (any leading dims), affine gamma/beta."""
    orig_shape = x.shape
    d = orig_shape[-1]
    x2d = x.reshape(-1, d)
    rows = x2d.shape[0]

    # Single TensorCore, no grid: whole tensor as one VMEM-resident block.
    # No padding needed — a block equal to the full array dims is exempt from
    # the (8,128) divisibility rule; Mosaic masks the ragged last sublane row.
    out = pl.pallas_call(
        _layernorm_kernel,
        out_shape=jax.ShapeDtypeStruct((rows, d), x.dtype),
        in_specs=[
            pl.BlockSpec(memory_space=pltpu.MemorySpace.VMEM),
            pl.BlockSpec(memory_space=pltpu.MemorySpace.VMEM),
            pl.BlockSpec(memory_space=pltpu.MemorySpace.VMEM),
        ],
        out_specs=pl.BlockSpec(memory_space=pltpu.MemorySpace.VMEM),
    )(x2d, gamma.reshape(1, d), beta.reshape(1, d))

    return out.reshape(orig_shape)


if __name__ == "__main__":
    key = jax.random.PRNGKey(0)
    # Shapes implied by the module: x180 = [1, 14, 14, 384], LayerNorm((384,))
    x = jax.random.normal(key, (1, 14, 14, 384), dtype=jnp.float32)

    # elementwise_affine=True params, PyTorch default init: gamma=1, beta=0
    gamma = jnp.ones((384,), dtype=jnp.float32)
    beta = jnp.zeros((384,), dtype=jnp.float32)

    y = layernorm_pallas(x, gamma, beta)
    jax.block_until_ready(y)

    # correctness check against pure-JAX reference
    mean = jnp.mean(x, axis=-1, keepdims=True)
    var = jnp.mean((x - mean) ** 2, axis=-1, keepdims=True)
    ref = (x - mean) * jax.lax.rsqrt(var + EPS) * gamma + beta
    assert jnp.max(jnp.abs(y - ref)) < 1e-4, "mismatch vs reference"

    print("KERNEL_OK")
</pallas_src>

<mosaic_0001>
module attributes {stable_mosaic.version = 11 : i64} {
  func.func @_layernorm_kernel(%arg0: memref<196x384xf32, #tpu.memory_space<vmem>>, %arg1: memref<1x384xf32, #tpu.memory_space<vmem>>, %arg2: memref<1x384xf32, #tpu.memory_space<vmem>>, %arg3: memref<196x384xf32, #tpu.memory_space<vmem>>) attributes {dimension_semantics = [], scalar_prefetch = 0 : i64, scratch_operands = 0 : i64, tpu.core_type = #tpu.core_type<tc>} {
    %c0 = arith.constant 0 : index
    %c0_0 = arith.constant 0 : index
    %0 = vector.load %arg0[%c0, %c0_0] : memref<196x384xf32, #tpu.memory_space<vmem>>, vector<196x384xf32>
    %cst = arith.constant dense<0.000000e+00> : vector<196xf32>
    %1 = vector.multi_reduction <add>, %0, %cst [1] : vector<196x384xf32> to vector<196xf32>
    %2 = vector.shape_cast %1 : vector<196xf32> to vector<196x1xf32>
    %cst_1 = arith.constant 0.00260416674 : f32
    %3 = vector.broadcast %cst_1 : f32 to vector<196x1xf32>
    %4 = arith.mulf %2, %3 : vector<196x1xf32>
    %5 = vector.broadcast %4 : vector<196x1xf32> to vector<196x384xf32>
    %6 = arith.subf %0, %5 : vector<196x384xf32>
    %7 = arith.mulf %6, %6 : vector<196x384xf32>
    %cst_2 = arith.constant dense<0.000000e+00> : vector<196xf32>
    %8 = vector.multi_reduction <add>, %7, %cst_2 [1] : vector<196x384xf32> to vector<196xf32>
    %9 = vector.shape_cast %8 : vector<196xf32> to vector<196x1xf32>
    %cst_3 = arith.constant 0.00260416674 : f32
    %10 = vector.broadcast %cst_3 : f32 to vector<196x1xf32>
    %11 = arith.mulf %9, %10 : vector<196x1xf32>
    %cst_4 = arith.constant 9.99999974E-6 : f32
    %12 = vector.broadcast %cst_4 : f32 to vector<196x1xf32>
    %13 = arith.addf %11, %12 : vector<196x1xf32>
    %14 = math.rsqrt %13 : vector<196x1xf32>
    %c0_5 = arith.constant 0 : index
    %c0_6 = arith.constant 0 : index
    %15 = vector.load %arg1[%c0_5, %c0_6] : memref<1x384xf32, #tpu.memory_space<vmem>>, vector<1x384xf32>
    %c0_7 = arith.constant 0 : index
    %c0_8 = arith.constant 0 : index
    %16 = vector.load %arg2[%c0_7, %c0_8] : memref<1x384xf32, #tpu.memory_space<vmem>>, vector<1x384xf32>
    %17 = vector.broadcast %14 : vector<196x1xf32> to vector<196x384xf32>
    %18 = arith.mulf %6, %17 : vector<196x384xf32>
    %19 = vector.broadcast %15 : vector<1x384xf32> to vector<196x384xf32>
    %20 = arith.mulf %18, %19 : vector<196x384xf32>
    %21 = vector.broadcast %16 : vector<1x384xf32> to vector<196x384xf32>
    %22 = arith.addf %20, %21 : vector<196x384xf32>
    %c0_9 = arith.constant 0 : index
    %c0_10 = arith.constant 0 : index
    %23 = vector.load %arg3[%c0_9, %c0_10] : memref<196x384xf32, #tpu.memory_space<vmem>>, vector<196x384xf32>
    tpu.vector_store %arg3[%c0_9, %c0_10], %22 {strides = array<i32>} : memref<196x384xf32, #tpu.memory_space<vmem>>, vector<196x384xf32>,
    return
  }
}

</mosaic_0001>

<llo_original>
// kernel: layernorm_pallas.1
$region0: #{layernorm_pallas.1}
  #allocation0 [shape = 'u32[]', space=smem, size = 0x4, offset = 0x4, fixed_abs, tag = 'smem constant byte address 0x4 - core index']
  #allocation1 [shape = 'u32[144,128]{1,0:T(1,128)}', space=vmem, size = 0x12000, scoped, tag = 'internal scratch']
  %s0 = inlined_call_operand.vmem [shape: f32[196,384], index: 0, kind: input, shape index: {}]
  %s1 = inlined_call_operand.vmem [shape: f32[1,384], index: 1, kind: input, shape index: {}]
  %s2 = inlined_call_operand.vmem [shape: f32[1,384], index: 2, kind: input, shape index: {}]
  %s3 = inlined_call_operand.vmem [shape: f32[196,384], index: 3, kind: output, shape index: {}]
  %s4 = sld [smem:[#allocation0]]
  $region22: #{layernorm_pallas.1} parent=0
    _
  %s6 = ssub.s32 1, %s4
  %s7 = scalar_select 0, %s6, %s4
  // Predicated region
  $region2: #{layernorm_pallas.1} parent=0 // pred_check
    _
  $region3: #{layernorm_pallas.1} parent=0 // pred_check_branch
    %9 = sbr.rel (0) target = $region5
  $region4: #{layernorm_pallas.1} parent=0 // pred_region
    _
  $region5: #{layernorm_pallas.1} parent=0 // pred_fallthru
    _
  // Predicated region
  $region6: #{layernorm_pallas.1} parent=0 // pred_check
    _
  $region7: #{layernorm_pallas.1} parent=0 // pred_check_branch
    %11 = sbr.rel (0) target = $region9
  $region8: #{layernorm_pallas.1} parent=0 // pred_region
    _
  $region9: #{layernorm_pallas.1} parent=0 // pred_fallthru
    _
  // Predicated region
  $region10: #{layernorm_pallas.1} parent=0 // pred_check
    _
  $region11: #{layernorm_pallas.1} parent=0 // pred_check_branch
    %13 = sbr.rel (0) target = $region13
  $region12: #{layernorm_pallas.1} parent=0 // pred_region
    _
  $region13: #{layernorm_pallas.1} parent=0 // pred_fallthru
    _
  %v14 = vld [vmem:[%s0] sm:$0xff]
  %v15 = vld [vmem:[%s0 + $0x8] sm:$0xff]
  %v16 = vld [vmem:[%s0 + $0x10] sm:$0xff]
  %v17 = vld [vmem:[%s0 + $0x18] sm:$0xff]
  %v18 = vld [vmem:[%s0 + $0x20] sm:$0xff]
  %v19 = vld [vmem:[%s0 + $0x28] sm:$0xff]
  %v20 = vld [vmem:[%s0 + $0x30] sm:$0xff]
  %v21 = vld [vmem:[%s0 + $0x38] sm:$0xff]
  %v22 = vld [vmem:[%s0 + $0x40] sm:$0xff]
  %v23 = vld [vmem:[%s0 + $0x48] sm:$0xff]
  %v24 = vld [vmem:[%s0 + $0x50] sm:$0xff]
  %v25 = vld [vmem:[%s0 + $0x58] sm:$0xff]
  %v26 = vld [vmem:[%s0 + $0x60] sm:$0xff]
  %v27 = vld [vmem:[%s0 + $0x68] sm:$0xff]
  %v28 = vld [vmem:[%s0 + $0x70] sm:$0xff]
  %v29 = vld [vmem:[%s0 + $0x78] sm:$0xff]
  %v30 = vld [vmem:[%s0 + $0x80] sm:$0xff]
  %v31 = vld [vmem:[%s0 + $0x88] sm:$0xff]
  %v32 = vld [vmem:[%s0 + $0x90] sm:$0xff]
  %v33 = vld [vmem:[%s0 + $0x98] sm:$0xff]
  %v34 = vld [vmem:[%s0 + $0xa0] sm:$0xff]
  %v35 = vld [vmem:[%s0 + $0xa8] sm:$0xff]
  %v36 = vld [vmem:[%s0 + $0xb0] sm:$0xff]
  %v37 = vld [vmem:[%s0 + $0xb8] sm:$0xff]
  %v38 = vld [vmem:[%s0 + $0xc0] sm:$0xff]
  %v39 = vld [vmem:[%s0 + $0xc8] sm:$0xff]
  %v40 = vld [vmem:[%s0 + $0xd0] sm:$0xff]
  %v41 = vld [vmem:[%s0 + $0xd8] sm:$0xff]
  %v42 = vld [vmem:[%s0 + $0xe0] sm:$0xff]
  %v43 = vld [vmem:[%s0 + $0xe8] sm:$0xff]
  %v44 = vld [vmem:[%s0 + $0xf0] sm:$0xff]
  %v45 = vld [vmem:[%s0 + $0xf8] sm:$0xff]
  %v46 = vld [vmem:[%s0 + $0x100] sm:$0xff]
  %v47 = vld [vmem:[%s0 + $0x108] sm:$0xff]
  %v48 = vld [vmem:[%s0 + $0x110] sm:$0xff]
  %v49 = vld [vmem:[%s0 + $0x118] sm:$0xff]
  %v50 = vld [vmem:[%s0 + $0x120] sm:$0xff]
  %v51 = vld [vmem:[%s0 + $0x128] sm:$0xff]
  %v52 = vld [vmem:[%s0 + $0x130] sm:$0xff]
  %v53 = vld [vmem:[%s0 + $0x138] sm:$0xff]
  %v54 = vld [vmem:[%s0 + $0x140] sm:$0xff]
  %v55 = vld [vmem:[%s0 + $0x148] sm:$0xff]
  %v56 = vld [vmem:[%s0 + $0x150] sm:$0xff]
  %v57 = vld [vmem:[%s0 + $0x158] sm:$0xff]
  %v58 = vld [vmem:[%s0 + $0x160] sm:$0xff]
  %v59 = vld [vmem:[%s0 + $0x168] sm:$0xff]
  %v60 = vld [vmem:[%s0 + $0x170] sm:$0xff]
  %v61 = vld [vmem:[%s0 + $0x178] sm:$0xff]
  %v62 = vld [vmem:[%s0 + $0x180] sm:$0xff]
  %v63 = vld [vmem:[%s0 + $0x188] sm:$0xff]
  %v64 = vld [vmem:[%s0 + $0x190] sm:$0xff]
  %v65 = vld [vmem:[%s0 + $0x198] sm:$0xff]
  %v66 = vld [vmem:[%s0 + $0x1a0] sm:$0xff]
  %v67 = vld [vmem:[%s0 + $0x1a8] sm:$0xff]
  %v68 = vld [vmem:[%s0 + $0x1b0] sm:$0xff]
  %v69 = vld [vmem:[%s0 + $0x1b8] sm:$0xff]
  %v70 = vld [vmem:[%s0 + $0x1c0] sm:$0xff]
  %v71 = vld [vmem:[%s0 + $0x1c8] sm:$0xff]
  %v72 = vld [vmem:[%s0 + $0x1d0] sm:$0xff]
  %v73 = vld [vmem:[%s0 + $0x1d8] sm:$0xff]
  %v74 = vld [vmem:[%s0 + $0x1e0] sm:$0xff]
  %v75 = vld [vmem:[%s0 + $0x1e8] sm:$0xff]
  %v76 = vld [vmem:[%s0 + $0x1f0] sm:$0xff]
  %v77 = vld [vmem:[%s0 + $0x1f8] sm:$0xff]
  %v78 = vld [vmem:[%s0 + $0x200] sm:$0xff]
  %v79 = vld [vmem:[%s0 + $0x208] sm:$0xff]
  %v80 = vld [vmem:[%s0 + $0x210] sm:$0xff]
  %v81 = vld [vmem:[%s0 + $0x218] sm:$0xff]
  %v82 = vld [vmem:[%s0 + $0x220] sm:$0xff]
  %v83 = vld [vmem:[%s0 + $0x228] sm:$0xff]
  %v84 = vld [vmem:[%s0 + $0x230] sm:$0xff]
  %v85 = vld [vmem:[%s0 + $0x238] sm:$0xff]
  %v86 = vld [vmem:[%s0 + $0x240] sm:$0xf]
  %v87 = vld [vmem:[%s0 + $0x248] sm:$0xf]
  %v88 = vld [vmem:[%s0 + $0x250] sm:$0xf]
  %v89 = vadd.f32 %v14, %v15
  %v90 = vadd.f32 %v89, %v16
  %91 = vadd.xlane.f32.xlu0 %v90
  %v92 = vpop.xlane.xlu0 %91
  %v93 = vadd.f32 %v17, %v18
  %v94 = vadd.f32 %v93, %v19
  %95 = vadd.xlane.f32.xlu0 %v94
  %v96 = vpop.xlane.xlu0 %95
  %v97 = vadd.f32 %v20, %v21
  %v98 = vadd.f32 %v97, %v22
  %99 = vadd.xlane.f32.xlu0 %v98
  %v100 = vpop.xlane.xlu0 %99
  %v101 = vadd.f32 %v23, %v24
  %v102 = vadd.f32 %v101, %v25
  %103 = vadd.xlane.f32.xlu0 %v102
  %v104 = vpop.xlane.xlu0 %103
  %v105 = vadd.f32 %v26, %v27
  %v106 = vadd.f32 %v105, %v28
  %107 = vadd.xlane.f32.xlu0 %v106
  %v108 = vpop.xlane.xlu0 %107
  %v109 = vadd.f32 %v29, %v30
  %v110 = vadd.f32 %v109, %v31
  %111 = vadd.xlane.f32.xlu0 %v110
  %v112 = vpop.xlane.xlu0 %111
  %v113 = vadd.f32 %v32, %v33
  %v114 = vadd.f32 %v113, %v34
  %115 = vadd.xlane.f32.xlu0 %v114
  %v116 = vpop.xlane.xlu0 %115
  %v117 = vadd.f32 %v35, %v36
  %v118 = vadd.f32 %v117, %v37
  %119 = vadd.xlane.f32.xlu0 %v118
  %v120 = vpop.xlane.xlu0 %119
  %v121 = vadd.f32 %v38, %v39
  %v122 = vadd.f32 %v121, %v40
  %123 = vadd.xlane.f32.xlu0 %v122
  %v124 = vpop.xlane.xlu0 %123
  %v125 = vadd.f32 %v41, %v42
  %v126 = vadd.f32 %v125, %v43
  %127 = vadd.xlane.f32.xlu0 %v126
  %v128 = vpop.xlane.xlu0 %127
  %v129 = vadd.f32 %v44, %v45
  %v130 = vadd.f32 %v129, %v46
  %131 = vadd.xlane.f32.xlu0 %v130
  %v132 = vpop.xlane.xlu0 %131
  %v133 = vadd.f32 %v47, %v48
  %v134 = vadd.f32 %v133, %v49
  %135 = vadd.xlane.f32.xlu0 %v134
  %v136 = vpop.xlane.xlu0 %135
  %v137 = vadd.f32 %v50, %v51
  %v138 = vadd.f32 %v137, %v52
  %139 = vadd.xlane.f32.xlu0 %v138
  %v140 = vpop.xlane.xlu0 %139
  %v141 = vadd.f32 %v53, %v54
  %v142 = vadd.f32 %v141, %v55
  %143 = vadd.xlane.f32.xlu0 %v142
  %v144 = vpop.xlane.xlu0 %143
  %v145 = vadd.f32 %v56, %v57
  %v146 = vadd.f32 %v145, %v58
  %147 = vadd.xlane.f32.xlu0 %v146
  %v148 = vpop.xlane.xlu0 %147
  %v149 = vadd.f32 %v59, %v60
  %v150 = vadd.f32 %v149, %v61
  %151 = vadd.xlane.f32.xlu0 %v150
  %v152 = vpop.xlane.xlu0 %151
  %v153 = vadd.f32 %v62, %v63
  %v154 = vadd.f32 %v153, %v64
  %155 = vadd.xlane.f32.xlu0 %v154
  %v156 = vpop.xlane.xlu0 %155
  %v157 = vadd.f32 %v65, %v66
  %v158 = vadd.f32 %v157, %v67
  %159 = vadd.xlane.f32.xlu0 %v158
  %v160 = vpop.xlane.xlu0 %159
  %v161 = vadd.f32 %v68, %v69
  %v162 = vadd.f32 %v161, %v70
  %163 = vadd.xlane.f32.xlu0 %v162
  %v164 = vpop.xlane.xlu0 %163
  %v165 = vadd.f32 %v71, %v72
  %v166 = vadd.f32 %v165, %v73
  %167 = vadd.xlane.f32.xlu0 %v166
  %v168 = vpop.xlane.xlu0 %167
  %v169 = vadd.f32 %v74, %v75
  %v170 = vadd.f32 %v169, %v76
  %171 = vadd.xlane.f32.xlu0 %v170
  %v172 = vpop.xlane.xlu0 %171
  %v173 = vadd.f32 %v77, %v78
  %v174 = vadd.f32 %v173, %v79
  %175 = vadd.xlane.f32.xlu0 %v174
  %v176 = vpop.xlane.xlu0 %175
  %v177 = vadd.f32 %v80, %v81
  %v178 = vadd.f32 %v177, %v82
  %179 = vadd.xlane.f32.xlu0 %v178
  %v180 = vpop.xlane.xlu0 %179
  %v181 = vadd.f32 %v83, %v84
  %v182 = vadd.f32 %v181, %v85
  %183 = vadd.xlane.f32.xlu0 %v182
  %v184 = vpop.xlane.xlu0 %183
  %vm185 = vcmask 1043456
  %v186 = vsel %vm185, %v86, 0.0
  %v187 = vsel %vm185, %v87, 0.0
  %v188 = vadd.f32 %v186, %v187
  %v189 = vsel %vm185, %v88, 0.0
  %v190 = vadd.f32 %v188, %v189
  %191 = vadd.xlane.f32.xlu0 %v190
  %v192 = vpop.xlane.xlu0 %191
  %v193 = vmul.f32 %v92, 0.0026041667
  %v194 = vmul.f32 %v96, 0.0026041667
  %v195 = vmul.f32 %v100, 0.0026041667
  %v196 = vmul.f32 %v104, 0.0026041667
  %v197 = vmul.f32 %v108, 0.0026041667
  %v198 = vmul.f32 %v112, 0.0026041667
  %v199 = vmul.f32 %v116, 0.0026041667
  %v200 = vmul.f32 %v120, 0.0026041667
  %v201 = vmul.f32 %v124, 0.0026041667
  %v202 = vmul.f32 %v128, 0.0026041667
  %v203 = vmul.f32 %v132, 0.0026041667
  %v204 = vmul.f32 %v136, 0.0026041667
  %v205 = vmul.f32 %v140, 0.0026041667
  %v206 = vmul.f32 %v144, 0.0026041667
  %v207 = vmul.f32 %v148, 0.0026041667
  %v208 = vmul.f32 %v152, 0.0026041667
  %v209 = vmul.f32 %v156, 0.0026041667
  %v210 = vmul.f32 %v160, 0.0026041667
  %v211 = vmul.f32 %v164, 0.0026041667
  %v212 = vmul.f32 %v168, 0.0026041667
  %v213 = vmul.f32 %v172, 0.0026041667
  %v214 = vmul.f32 %v176, 0.0026041667
  %v215 = vmul.f32 %v180, 0.0026041667
  %v216 = vmul.f32 %v184, 0.0026041667
  %v217 = vmul.f32 %v192, 0.0026041667
  %v218 = vsub.f32 %v14, %v193
  %v219 = vsub.f32 %v15, %v193
  %v220 = vsub.f32 %v16, %v193
  %v221 = vsub.f32 %v17, %v194
  %v222 = vsub.f32 %v18, %v194
  %v223 = vsub.f32 %v19, %v194
  %v224 = vsub.f32 %v20, %v195
  %v225 = vsub.f32 %v21, %v195
  %v226 = vsub.f32 %v22, %v195
  %v227 = vsub.f32 %v23, %v196
  %v228 = vsub.f32 %v24, %v196
  %v229 = vsub.f32 %v25, %v196
  %v230 = vsub.f32 %v26, %v197
  %v231 = vsub.f32 %v27, %v197
  %v232 = vsub.f32 %v28, %v197
  %v233 = vsub.f32 %v29, %v198
  %v234 = vsub.f32 %v30, %v198
  %v235 = vsub.f32 %v31, %v198
  %v236 = vsub.f32 %v32, %v199
  %v237 = vsub.f32 %v33, %v199
  %v238 = vsub.f32 %v34, %v199
  %v239 = vsub.f32 %v35, %v200
  %v240 = vsub.f32 %v36, %v200
  %v241 = vsub.f32 %v37, %v200
  %v242 = vsub.f32 %v38, %v201
  %v243 = vsub.f32 %v39, %v201
  %v244 = vsub.f32 %v40, %v201
  %v245 = vsub.f32 %v41, %v202
  %v246 = vsub.f32 %v42, %v202
  %v247 = vsub.f32 %v43, %v202
  %v248 = vsub.f32 %v44, %v203
  %v249 = vsub.f32 %v45, %v203
  %v250 = vsub.f32 %v46, %v203
  %v251 = vsub.f32 %v47, %v204
  %v252 = vsub.f32 %v48, %v204
  %v253 = vsub.f32 %v49, %v204
  %v254 = vsub.f32 %v50, %v205
  %v255 = vsub.f32 %v51, %v205
  %v256 = vsub.f32 %v52, %v205
  %v257 = vsub.f32 %v53, %v206
  %v258 = vsub.f32 %v54, %v206
  %v259 = vsub.f32 %v55, %v206
  %v260 = vsub.f32 %v56, %v207
  %v261 = vsub.f32 %v57, %v207
  %v262 = vsub.f32 %v58, %v207
  %v263 = vsub.f32 %v59, %v208
  %v264 = vsub.f32 %v60, %v208
  %v265 = vsub.f32 %v61, %v208
  %v266 = vsub.f32 %v62, %v209
  %v267 = vsub.f32 %v63, %v209
  %v268 = vsub.f32 %v64, %v209
  %v269 = vsub.f32 %v65, %v210
  %v270 = vsub.f32 %v66, %v210
  %v271 = vsub.f32 %v67, %v210
  %v272 = vsub.f32 %v68, %v211
  %v273 = vsub.f32 %v69, %v211
  %v274 = vsub.f32 %v70, %v211
  %v275 = vsub.f32 %v71, %v212
  %v276 = vsub.f32 %v72, %v212
  %v277 = vsub.f32 %v73, %v212
  %v278 = vsub.f32 %v74, %v213
  %v279 = vsub.f32 %v75, %v213
  %v280 = vsub.f32 %v76, %v213
  %v281 = vsub.f32 %v77, %v214
  %v282 = vsub.f32 %v78, %v214
  %v283 = vsub.f32 %v79, %v214
  %v284 = vsub.f32 %v80, %v215
  %v285 = vsub.f32 %v81, %v215
  %v286 = vsub.f32 %v82, %v215
  %v287 = vsub.f32 %v83, %v216
  %v288 = vsub.f32 %v84, %v216
  %v289 = vsub.f32 %v85, %v216
  %v290 = vsub.f32 %v86, %v217
  %v291 = vsub.f32 %v87, %v217
  %v292 = vsub.f32 %v88, %v217
  %v293 = vmul.f32 %v218, %v218
  %v294 = vmul.f32 %v219, %v219
  %v295 = vmul.f32 %v220, %v220
  %v296 = vmul.f32 %v221, %v221
  %v297 = vmul.f32 %v222, %v222
  %v298 = vmul.f32 %v223, %v223
  %v299 = vmul.f32 %v224, %v224
  %v300 = vmul.f32 %v225, %v225
  %v301 = vmul.f32 %v226, %v226
  %v302 = vmul.f32 %v227, %v227
  %v303 = vmul.f32 %v228, %v228
  %v304 = vmul.f32 %v229, %v229
  %v305 = vmul.f32 %v230, %v230
  %v306 = vmul.f32 %v231, %v231
  %v307 = vmul.f32 %v232, %v232
  %v308 = vmul.f32 %v233, %v233
  %v309 = vmul.f32 %v234, %v234
  %v310 = vmul.f32 %v235, %v235
  %v311 = vmul.f32 %v236, %v236
  %v312 = vmul.f32 %v237, %v237
  %v313 = vmul.f32 %v238, %v238
  %v314 = vmul.f32 %v239, %v239
  %v315 = vmul.f32 %v240, %v240
  %v316 = vmul.f32 %v241, %v241
  %v317 = vmul.f32 %v242, %v242
  %v318 = vmul.f32 %v243, %v243
  %v319 = vmul.f32 %v244, %v244
  %v320 = vmul.f32 %v245, %v245
  %v321 = vmul.f32 %v246, %v246
  %v322 = vmul.f32 %v247, %v247
  %v323 = vmul.f32 %v248, %v248
  %v324 = vmul.f32 %v249, %v249
  %v325 = vmul.f32 %v250, %v250
  %v326 = vmul.f32 %v251, %v251
  %v327 = vmul.f32 %v252, %v252
  %v328 = vmul.f32 %v253, %v253
  %v329 = vmul.f32 %v254, %v254
  %v330 = vmul.f32 %v255, %v255
  %v331 = vmul.f32 %v256, %v256
  %v332 = vmul.f32 %v257, %v257
  %v333 = vmul.f32 %v258, %v258
  %v334 = vmul.f32 %v259, %v259
  %v335 = vmul.f32 %v260, %v260
  %v336 = vmul.f32 %v261, %v261
  %v337 = vmul.f32 %v262, %v262
  %v338 = vmul.f32 %v263, %v263
  %v339 = vmul.f32 %v264, %v264
  %v340 = vmul.f32 %v265, %v265
  %v341 = vmul.f32 %v266, %v266
  %v342 = vmul.f32 %v267, %v267
  %v343 = vmul.f32 %v268, %v268
  %v344 = vmul.f32 %v269, %v269
  %v345 = vmul.f32 %v270, %v270
  %v346 = vmul.f32 %v271, %v271
  %v347 = vmul.f32 %v272, %v272
  %v348 = vmul.f32 %v273, %v273
  %v349 = vmul.f32 %v274, %v274
  %v350 = vmul.f32 %v275, %v275
  %v351 = vmul.f32 %v276, %v276
  %v352 = vmul.f32 %v277, %v277
  %v353 = vmul.f32 %v278, %v278
  %v354 = vmul.f32 %v279, %v279
  %v355 = vmul.f32 %v280, %v280
  %v356 = vmul.f32 %v281, %v281
  %v357 = vmul.f32 %v282, %v282
  %v358 = vmul.f32 %v283, %v283
  %v359 = vmul.f32 %v284, %v284
  %v360 = vmul.f32 %v285, %v285
  %v361 = vmul.f32 %v286, %v286
  %v362 = vmul.f32 %v287, %v287
  %v363 = vmul.f32 %v288, %v288
  %v364 = vmul.f32 %v289, %v289
  %v365 = vmul.f32 %v290, %v290
  %v366 = vmul.f32 %v291, %v291
  %v367 = vmul.f32 %v292, %v292
  %v368 = vadd.f32 %v293, %v294
  %v369 = vadd.f32 %v368, %v295
  %370 = vadd.xlane.f32.xlu0 %v369
  %v371 = vpop.xlane.xlu0 %370
  %v372 = vadd.f32 %v296, %v297
  %v373 = vadd.f32 %v372, %v298
  %374 = vadd.xlane.f32.xlu0 %v373
  %v375 = vpop.xlane.xlu0 %374
  %v376 = vadd.f32 %v299, %v300
  %v377 = vadd.f32 %v376, %v301
  %378 = vadd.xlane.f32.xlu0 %v377
  %v379 = vpop.xlane.xlu0 %378
  %v380 = vadd.f32 %v302, %v303
  %v381 = vadd.f32 %v380, %v304
  %382 = vadd.xlane.f32.xlu0 %v381
  %v383 = vpop.xlane.xlu0 %382
  %v384 = vadd.f32 %v305, %v306
  %v385 = vadd.f32 %v384, %v307
  %386 = vadd.xlane.f32.xlu0 %v385
  %v387 = vpop.xlane.xlu0 %386
  %v388 = vadd.f32 %v308, %v309
  %v389 = vadd.f32 %v388, %v310
  %390 = vadd.xlane.f32.xlu0 %v389
  %v391 = vpop.xlane.xlu0 %390
  %v392 = vadd.f32 %v311, %v312
  %v393 = vadd.f32 %v392, %v313
  %394 = vadd.xlane.f32.xlu0 %v393
  %v395 = vpop.xlane.xlu0 %394
  %v396 = vadd.f32 %v314, %v315
  %v397 = vadd.f32 %v396, %v316
  %398 = vadd.xlane.f32.xlu0 %v397
  %v399 = vpop.xlane.xlu0 %398
  %v400 = vadd.f32 %v317, %v318
  %v401 = vadd.f32 %v400, %v319
  %402 = vadd.xlane.f32.xlu0 %v401
  %v403 = vpop.xlane.xlu0 %402
  %v404 = vadd.f32 %v320, %v321
  %v405 = vadd.f32 %v404, %v322
  %406 = vadd.xlane.f32.xlu0 %v405
  %v407 = vpop.xlane.xlu0 %406
  %v408 = vadd.f32 %v323, %v324
  %v409 = vadd.f32 %v408, %v325
  %410 = vadd.xlane.f32.xlu0 %v409
  %v411 = vpop.xlane.xlu0 %410
  %v412 = vadd.f32 %v326, %v327
  %v413 = vadd.f32 %v412, %v328
  %414 = vadd.xlane.f32.xlu0 %v413
  %v415 = vpop.xlane.xlu0 %414
  %v416 = vadd.f32 %v329, %v330
  %v417 = vadd.f32 %v416, %v331
  %418 = vadd.xlane.f32.xlu0 %v417
  %v419 = vpop.xlane.xlu0 %418
  %v420 = vadd.f32 %v332, %v333
  %v421 = vadd.f32 %v420, %v334
  %422 = vadd.xlane.f32.xlu0 %v421
  %v423 = vpop.xlane.xlu0 %422
  %v424 = vadd.f32 %v335, %v336
  %v425 = vadd.f32 %v424, %v337
  %426 = vadd.xlane.f32.xlu0 %v425
  %v427 = vpop.xlane.xlu0 %426
  %v428 = vadd.f32 %v338, %v339
  %v429 = vadd.f32 %v428, %v340
  %430 = vadd.xlane.f32.xlu0 %v429
  %v431 = vpop.xlane.xlu0 %430
  %v432 = vadd.f32 %v341, %v342
  %v433 = vadd.f32 %v432, %v343
  %434 = vadd.xlane.f32.xlu0 %v433
  %v435 = vpop.xlane.xlu0 %434
  %v436 = vadd.f32 %v344, %v345
  %v437 = vadd.f32 %v436, %v346
  %438 = vadd.xlane.f32.xlu0 %v437
  %v439 = vpop.xlane.xlu0 %438
  %v440 = vadd.f32 %v347, %v348
  %v441 = vadd.f32 %v440, %v349
  %442 = vadd.xlane.f32.xlu0 %v441
  %v443 = vpop.xlane.xlu0 %442
  %v444 = vadd.f32 %v350, %v351
  %v445 = vadd.f32 %v444, %v352
  %446 = vadd.xlane.f32.xlu0 %v445
  %v447 = vpop.xlane.xlu0 %446
  %v448 = vadd.f32 %v353, %v354
  %v449 = vadd.f32 %v448, %v355
  %450 = vadd.xlane.f32.xlu0 %v449
  %v451 = vpop.xlane.xlu0 %450
  %v452 = vadd.f32 %v356, %v357
  %v453 = vadd.f32 %v452, %v358
  %454 = vadd.xlane.f32.xlu0 %v453
  %v455 = vpop.xlane.xlu0 %454
  %v456 = vadd.f32 %v359, %v360
  %v457 = vadd.f32 %v456, %v361
  %458 = vadd.xlane.f32.xlu0 %v457
  %v459 = vpop.xlane.xlu0 %458
  %v460 = vadd.f32 %v362, %v363
  %v461 = vadd.f32 %v460, %v364
  %462 = vadd.xlane.f32.xlu0 %v461
  %v463 = vpop.xlane.xlu0 %462
  %v464 = vsel %vm185, %v365, 0.0
  %v465 = vsel %vm185, %v366, 0.0
  %v466 = vadd.f32 %v464, %v465
  %v467 = vsel %vm185, %v367, 0.0
  %v468 = vadd.f32 %v466, %v467
  %469 = vadd.xlane.f32.xlu0 %v468
  %v470 = vpop.xlane.xlu0 %469
  %v471 = vmul.f32 %v371, 0.0026041667
  %v472 = vmul.f32 %v375, 0.0026041667
  %v473 = vmul.f32 %v379, 0.0026041667
  %v474 = vmul.f32 %v383, 0.0026041667
  %v475 = vmul.f32 %v387, 0.0026041667
  %v476 = vmul.f32 %v391, 0.0026041667
  %v477 = vmul.f32 %v395, 0.0026041667
  %v478 = vmul.f32 %v399, 0.0026041667
  %v479 = vmul.f32 %v403, 0.0026041667
  %v480 = vmul.f32 %v407, 0.0026041667
  %v481 = vmul.f32 %v411, 0.0026041667
  %v482 = vmul.f32 %v415, 0.0026041667
  %v483 = vmul.f32 %v419, 0.0026041667
  %v484 = vmul.f32 %v423, 0.0026041667
  %v485 = vmul.f32 %v427, 0.0026041667
  %v486 = vmul.f32 %v431, 0.0026041667
  %v487 = vmul.f32 %v435, 0.0026041667
  %v488 = vmul.f32 %v439, 0.0026041667
  %v489 = vmul.f32 %v443, 0.0026041667
  %v490 = vmul.f32 %v447, 0.0026041667
  %v491 = vmul.f32 %v451, 0.0026041667
  %v492 = vmul.f32 %v455, 0.0026041667
  %v493 = vmul.f32 %v459, 0.0026041667
  %v494 = vmul.f32 %v463, 0.0026041667
  %v495 = vmul.f32 %v470, 0.0026041667
  %v496 = vadd.f32 %v471, 1e-05
  %v497 = vadd.f32 %v472, 1e-05
  %v498 = vadd.f32 %v473, 1e-05
  %v499 = vadd.f32 %v474, 1e-05
  %v500 = vadd.f32 %v475, 1e-05
  %v501 = vadd.f32 %v476, 1e-05
  %v502 = vadd.f32 %v477, 1e-05
  %v503 = vadd.f32 %v478, 1e-05
  %v504 = vadd.f32 %v479, 1e-05
  %v505 = vadd.f32 %v480, 1e-05
  %v506 = vadd.f32 %v481, 1e-05
  %v507 = vadd.f32 %v482, 1e-05
  %v508 = vadd.f32 %v483, 1e-05
  %v509 = vadd.f32 %v484, 1e-05
  %v510 = vadd.f32 %v485, 1e-05
  %v511 = vadd.f32 %v486, 1e-05
  %v512 = vadd.f32 %v487, 1e-05
  %v513 = vadd.f32 %v488, 1e-05
  %v514 = vadd.f32 %v489, 1e-05
  %v515 = vadd.f32 %v490, 1e-05
  %v516 = vadd.f32 %v491, 1e-05
  %v517 = vadd.f32 %v492, 1e-05
  %v518 = vadd.f32 %v493, 1e-05
  %v519 = vadd.f32 %v494, 1e-05
  %v520 = vadd.f32 %v495, 1e-05
  %v521 = vrsqrt.pop %v496
  %v522 = vrsqrt.pop %v497
  %v523 = vrsqrt.pop %v498
  %v524 = vrsqrt.pop %v499
  %v525 = vrsqrt.pop %v500
  %v526 = vrsqrt.pop %v501
  %v527 = vrsqrt.pop %v502
  %v528 = vrsqrt.pop %v503
  %v529 = vrsqrt.pop %v504
  %v530 = vrsqrt.pop %v505
  %v531 = vrsqrt.pop %v506
  %v532 = vrsqrt.pop %v507
  %v533 = vrsqrt.pop %v508
  %v534 = vrsqrt.pop %v509
  %v535 = vrsqrt.pop %v510
  %v536 = vrsqrt.pop %v511
  %v537 = vrsqrt.pop %v512
  %v538 = vrsqrt.pop %v513
  %v539 = vrsqrt.pop %v514
  %v540 = vrsqrt.pop %v515
  %v541 = vrsqrt.pop %v516
  %v542 = vrsqrt.pop %v517
  %v543 = vrsqrt.pop %v518
  %v544 = vrsqrt.pop %v519
  %v545 = vrsqrt.pop %v520
  %v546 = vld [vmem:[%s1] sm:$0x7]
  %v547 = vld [vmem:[%s2] sm:$0x7]
  %v548 = vmul.f32 %v218, %v521
  %v549 = vmul.f32 %v219, %v521
  %v550 = vmul.f32 %v220, %v521
  %v551 = vmul.f32 %v221, %v522
  %v552 = vmul.f32 %v222, %v522
  %v553 = vmul.f32 %v223, %v522
  %v554 = vmul.f32 %v224, %v523
  %v555 = vmul.f32 %v225, %v523
  %v556 = vmul.f32 %v226, %v523
  %v557 = vmul.f32 %v227, %v524
  %v558 = vmul.f32 %v228, %v524
  %v559 = vmul.f32 %v229, %v524
  %v560 = vmul.f32 %v230, %v525
  %v561 = vmul.f32 %v231, %v525
  %v562 = vmul.f32 %v232, %v525
  %v563 = vmul.f32 %v233, %v526
  %v564 = vmul.f32 %v234, %v526
  %v565 = vmul.f32 %v235, %v526
  %v566 = vmul.f32 %v236, %v527
  %v567 = vmul.f32 %v237, %v527
  %v568 = vmul.f32 %v238, %v527
  %v569 = vmul.f32 %v239, %v528
  %v570 = vmul.f32 %v240, %v528
  %v571 = vmul.f32 %v241, %v528
  %v572 = vmul.f32 %v242, %v529
  %v573 = vmul.f32 %v243, %v529
  %v574 = vmul.f32 %v244, %v529
  %v575 = vmul.f32 %v245, %v530
  %v576 = vmul.f32 %v246, %v530
  %v577 = vmul.f32 %v247, %v530
  %v578 = vmul.f32 %v248, %v531
  %v579 = vmul.f32 %v249, %v531
  %v580 = vmul.f32 %v250, %v531
  %v581 = vmul.f32 %v251, %v532
  %v582 = vmul.f32 %v252, %v532
  %v583 = vmul.f32 %v253, %v532
  %v584 = vmul.f32 %v254, %v533
  %v585 = vmul.f32 %v255, %v533
  %v586 = vmul.f32 %v256, %v533
  %v587 = vmul.f32 %v257, %v534
  %v588 = vmul.f32 %v258, %v534
  %v589 = vmul.f32 %v259, %v534
  %v590 = vmul.f32 %v260, %v535
  %v591 = vmul.f32 %v261, %v535
  %v592 = vmul.f32 %v262, %v535
  %v593 = vmul.f32 %v263, %v536
  %v594 = vmul.f32 %v264, %v536
  %v595 = vmul.f32 %v265, %v536
  %v596 = vmul.f32 %v266, %v537
  %v597 = vmul.f32 %v267, %v537
  %v598 = vmul.f32 %v268, %v537
  %v599 = vmul.f32 %v269, %v538
  %v600 = vmul.f32 %v270, %v538
  %v601 = vmul.f32 %v271, %v538
  %v602 = vmul.f32 %v272, %v539
  %v603 = vmul.f32 %v273, %v539
  %v604 = vmul.f32 %v274, %v539
  %v605 = vmul.f32 %v275, %v540
  %v606 = vmul.f32 %v276, %v540
  %v607 = vmul.f32 %v277, %v540
  %v608 = vmul.f32 %v278, %v541
  %v609 = vmul.f32 %v279, %v541
  %v610 = vmul.f32 %v280, %v541
  %v611 = vmul.f32 %v281, %v542
  %v612 = vmul.f32 %v282, %v542
  %v613 = vmul.f32 %v283, %v542
  %v614 = vmul.f32 %v284, %v543
  %v615 = vmul.f32 %v285, %v543
  %v616 = vmul.f32 %v286, %v543
  %v617 = vmul.f32 %v287, %v544
  %v618 = vmul.f32 %v288, %v544
  %v619 = vmul.f32 %v289, %v544
  %v620 = vmul.f32 %v290, %v545
  %v621 = vmul.f32 %v291, %v545
  %v622 = vmul.f32 %v292, %v545
  %v624 = vlaneseq
  %v625 = vshrl.u32 %v624, 7
  %v626 = vsub.s32 0, %v625
  %v627 = vrot.slane %v546, %v626
  %v628 = vlaneseq
  %v629 = vshrl.u32 %v628, 7
  %v630 = vsub.s32 1, %v629
  %v631 = vrot.slane %v546, %v630
  %v632 = vlaneseq
  %v633 = vshrl.u32 %v632, 7
  %v634 = vsub.s32 2, %v633
  %v635 = vrot.slane %v546, %v634
  %v639 = vmul.f32 %v548, %v627
  %v640 = vmul.f32 %v549, %v631
  %v641 = vmul.f32 %v550, %v635
  %v642 = vmul.f32 %v551, %v627
  %v643 = vmul.f32 %v552, %v631
  %v644 = vmul.f32 %v553, %v635
  %v645 = vmul.f32 %v554, %v627
  %v646 = vmul.f32 %v555, %v631
  %v647 = vmul.f32 %v556, %v635
  %v648 = vmul.f32 %v557, %v627
  %v649 = vmul.f32 %v558, %v631
  %v650 = vmul.f32 %v559, %v635
  %v651 = vmul.f32 %v560, %v627
  %v652 = vmul.f32 %v561, %v631
  %v653 = vmul.f32 %v562, %v635
  %v654 = vmul.f32 %v563, %v627
  %v655 = vmul.f32 %v564, %v631
  %v656 = vmul.f32 %v565, %v635
  %v657 = vmul.f32 %v566, %v627
  %v658 = vmul.f32 %v567, %v631
  %v659 = vmul.f32 %v568, %v635
  %v660 = vmul.f32 %v569, %v627
  %v661 = vmul.f32 %v570, %v631
  %v662 = vmul.f32 %v571, %v635
  %v663 = vmul.f32 %v572, %v627
  %v664 = vmul.f32 %v573, %v631
  %v665 = vmul.f32 %v574, %v635
  %v666 = vmul.f32 %v575, %v627
  %v667 = vmul.f32 %v576, %v631
  %v668 = vmul.f32 %v577, %v635
  %v669 = vmul.f32 %v578, %v627
  %v670 = vmul.f32 %v579, %v631
  %v671 = vmul.f32 %v580, %v635
  %v672 = vmul.f32 %v581, %v627
  %v673 = vmul.f32 %v582, %v631
  %v674 = vmul.f32 %v583, %v635
  %v675 = vmul.f32 %v584, %v627
  %v676 = vmul.f32 %v585, %v631
  %v677 = vmul.f32 %v586, %v635
  %v678 = vmul.f32 %v587, %v627
  %v679 = vmul.f32 %v588, %v631
  %v680 = vmul.f32 %v589, %v635
  %v681 = vmul.f32 %v590, %v627
  %v682 = vmul.f32 %v591, %v631
  %v683 = vmul.f32 %v592, %v635
  %v684 = vmul.f32 %v593, %v627
  %v685 = vmul.f32 %v594, %v631
  %v686 = vmul.f32 %v595, %v635
  %v687 = vmul.f32 %v596, %v627
  %v688 = vmul.f32 %v597, %v631
  %v689 = vmul.f32 %v598, %v635
  %v690 = vmul.f32 %v599, %v627
  %v691 = vmul.f32 %v600, %v631
  %v692 = vmul.f32 %v601, %v635
  %v693 = vmul.f32 %v602, %v627
  %v694 = vmul.f32 %v603, %v631
  %v695 = vmul.f32 %v604, %v635
  %v696 = vmul.f32 %v605, %v627
  %v697 = vmul.f32 %v606, %v631
  %v698 = vmul.f32 %v607, %v635
  %v699 = vmul.f32 %v608, %v627
  %v700 = vmul.f32 %v609, %v631
  %v701 = vmul.f32 %v610, %v635
  %v702 = vmul.f32 %v611, %v627
  %v703 = vmul.f32 %v612, %v631
  %v704 = vmul.f32 %v613, %v635
  %v705 = vmul.f32 %v614, %v627
  %v706 = vmul.f32 %v615, %v631
  %v707 = vmul.f32 %v616, %v635
  %v708 = vmul.f32 %v617, %v627
  %v709 = vmul.f32 %v618, %v631
  %v710 = vmul.f32 %v619, %v635
  %v711 = vmul.f32 %v620, %v627
  %v712 = vmul.f32 %v621, %v631
  %v713 = vmul.f32 %v622, %v635
  %v715 = vlaneseq
  %v716 = vshrl.u32 %v715, 7
  %v717 = vsub.s32 0, %v716
  %v718 = vrot.slane %v547, %v717
  %v719 = vlaneseq
  %v720 = vshrl.u32 %v719, 7
  %v721 = vsub.s32 1, %v720
  %v722 = vrot.slane %v547, %v721
  %v723 = vlaneseq
  %v724 = vshrl.u32 %v723, 7
  %v725 = vsub.s32 2, %v724
  %v726 = vrot.slane %v547, %v725
  %v730 = vadd.f32 %v639, %v718
  %v731 = vadd.f32 %v640, %v722
  %v732 = vadd.f32 %v641, %v726
  %v733 = vadd.f32 %v642, %v718
  %v734 = vadd.f32 %v643, %v722
  %v735 = vadd.f32 %v644, %v726
  %v736 = vadd.f32 %v645, %v718
  %v737 = vadd.f32 %v646, %v722
  %v738 = vadd.f32 %v647, %v726
  %v739 = vadd.f32 %v648, %v718
  %v740 = vadd.f32 %v649, %v722
  %v741 = vadd.f32 %v650, %v726
  %v742 = vadd.f32 %v651, %v718
  %v743 = vadd.f32 %v652, %v722
  %v744 = vadd.f32 %v653, %v726
  %v745 = vadd.f32 %v654, %v718
  %v746 = vadd.f32 %v655, %v722
  %v747 = vadd.f32 %v656, %v726
  %v748 = vadd.f32 %v657, %v718
  %v749 = vadd.f32 %v658, %v722
  %v750 = vadd.f32 %v659, %v726
  %v751 = vadd.f32 %v660, %v718
  %v752 = vadd.f32 %v661, %v722
  %v753 = vadd.f32 %v662, %v726
  %v754 = vadd.f32 %v663, %v718
  %v755 = vadd.f32 %v664, %v722
  %v756 = vadd.f32 %v665, %v726
  %v757 = vadd.f32 %v666, %v718
  %v758 = vadd.f32 %v667, %v722
  %v759 = vadd.f32 %v668, %v726
  %v760 = vadd.f32 %v669, %v718
  %v761 = vadd.f32 %v670, %v722
  %v762 = vadd.f32 %v671, %v726
  %v763 = vadd.f32 %v672, %v718
  %v764 = vadd.f32 %v673, %v722
  %v765 = vadd.f32 %v674, %v726
  %v766 = vadd.f32 %v675, %v718
  %v767 = vadd.f32 %v676, %v722
  %v768 = vadd.f32 %v677, %v726
  %v769 = vadd.f32 %v678, %v718
  %v770 = vadd.f32 %v679, %v722
  %v771 = vadd.f32 %v680, %v726
  %v772 = vadd.f32 %v681, %v718
  %v773 = vadd.f32 %v682, %v722
  %v774 = vadd.f32 %v683, %v726
  %v775 = vadd.f32 %v684, %v718
  %v776 = vadd.f32 %v685, %v722
  %v777 = vadd.f32 %v686, %v726
  %v778 = vadd.f32 %v687, %v718
  %v779 = vadd.f32 %v688, %v722
  %v780 = vadd.f32 %v689, %v726
  %v781 = vadd.f32 %v690, %v718
  %v782 = vadd.f32 %v691, %v722
  %v783 = vadd.f32 %v692, %v726
  %v784 = vadd.f32 %v693, %v718
  %v785 = vadd.f32 %v694, %v722
  %v786 = vadd.f32 %v695, %v726
  %v787 = vadd.f32 %v696, %v718
  %v788 = vadd.f32 %v697, %v722
  %v789 = vadd.f32 %v698, %v726
  %v790 = vadd.f32 %v699, %v718
  %v791 = vadd.f32 %v700, %v722
  %v792 = vadd.f32 %v701, %v726
  %v793 = vadd.f32 %v702, %v718
  %v794 = vadd.f32 %v703, %v722
  %v795 = vadd.f32 %v704, %v726
  %v796 = vadd.f32 %v705, %v718
  %v797 = vadd.f32 %v706, %v722
  %v798 = vadd.f32 %v707, %v726
  %v799 = vadd.f32 %v708, %v718
  %v800 = vadd.f32 %v709, %v722
  %v801 = vadd.f32 %v710, %v726
  %v802 = vadd.f32 %v711, %v718
  %v803 = vadd.f32 %v712, %v722
  %v804 = vadd.f32 %v713, %v726
  %805 = vst [vmem:[%s3] sm:$0xff] %v730
  %806 = vst [vmem:[%s3 + $0x8] sm:$0xff] %v731
  %807 = vst [vmem:[%s3 + $0x10] sm:$0xff] %v732
  %808 = vst [vmem:[%s3 + $0x18] sm:$0xff] %v733
  %809 = vst [vmem:[%s3 + $0x20] sm:$0xff] %v734
  %810 = vst [vmem:[%s3 + $0x28] sm:$0xff] %v735
  %811 = vst [vmem:[%s3 + $0x30] sm:$0xff] %v736
  %812 = vst [vmem:[%s3 + $0x38] sm:$0xff] %v737
  %813 = vst [vmem:[%s3 + $0x40] sm:$0xff] %v738
  %814 = vst [vmem:[%s3 + $0x48] sm:$0xff] %v739
  %815 = vst [vmem:[%s3 + $0x50] sm:$0xff] %v740
  %816 = vst [vmem:[%s3 + $0x58] sm:$0xff] %v741
  %817 = vst [vmem:[%s3 + $0x60] sm:$0xff] %v742
  %818 = vst [vmem:[%s3 + $0x68] sm:$0xff] %v743
  %819 = vst [vmem:[%s3 + $0x70] sm:$0xff] %v744
  %820 = vst [vmem:[%s3 + $0x78] sm:$0xff] %v745
  %821 = vst [vmem:[%s3 + $0x80] sm:$0xff] %v746
  %822 = vst [vmem:[%s3 + $0x88] sm:$0xff] %v747
  %823 = vst [vmem:[%s3 + $0x90] sm:$0xff] %v748
  %824 = vst [vmem:[%s3 + $0x98] sm:$0xff] %v749
  %825 = vst [vmem:[%s3 + $0xa0] sm:$0xff] %v750
  %826 = vst [vmem:[%s3 + $0xa8] sm:$0xff] %v751
  %827 = vst [vmem:[%s3 + $0xb0] sm:$0xff] %v752
  %828 = vst [vmem:[%s3 + $0xb8] sm:$0xff] %v753
  %829 = vst [vmem:[%s3 + $0xc0] sm:$0xff] %v754
  %830 = vst [vmem:[%s3 + $0xc8] sm:$0xff] %v755
  %831 = vst [vmem:[%s3 + $0xd0] sm:$0xff] %v756
  %832 = vst [vmem:[%s3 + $0xd8] sm:$0xff] %v757
  %833 = vst [vmem:[%s3 + $0xe0] sm:$0xff] %v758
  %834 = vst [vmem:[%s3 + $0xe8] sm:$0xff] %v759
  %835 = vst [vmem:[%s3 + $0xf0] sm:$0xff] %v760
  %836 = vst [vmem:[%s3 + $0xf8] sm:$0xff] %v761
  %837 = vst [vmem:[%s3 + $0x100] sm:$0xff] %v762
  %838 = vst [vmem:[%s3 + $0x108] sm:$0xff] %v763
  %839 = vst [vmem:[%s3 + $0x110] sm:$0xff] %v764
  %840 = vst [vmem:[%s3 + $0x118] sm:$0xff] %v765
  %841 = vst [vmem:[%s3 + $0x120] sm:$0xff] %v766
  %842 = vst [vmem:[%s3 + $0x128] sm:$0xff] %v767
  %843 = vst [vmem:[%s3 + $0x130] sm:$0xff] %v768
  %844 = vst [vmem:[%s3 + $0x138] sm:$0xff] %v769
  %845 = vst [vmem:[%s3 + $0x140] sm:$0xff] %v770
  %846 = vst [vmem:[%s3 + $0x148] sm:$0xff] %v771
  %847 = vst [vmem:[%s3 + $0x150] sm:$0xff] %v772
  %848 = vst [vmem:[%s3 + $0x158] sm:$0xff] %v773
  %849 = vst [vmem:[%s3 + $0x160] sm:$0xff] %v774
  %850 = vst [vmem:[%s3 + $0x168] sm:$0xff] %v775
  %851 = vst [vmem:[%s3 + $0x170] sm:$0xff] %v776
  %852 = vst [vmem:[%s3 + $0x178] sm:$0xff] %v777
  %853 = vst [vmem:[%s3 + $0x180] sm:$0xff] %v778
  %854 = vst [vmem:[%s3 + $0x188] sm:$0xff] %v779
  %855 = vst [vmem:[%s3 + $0x190] sm:$0xff] %v780
  %856 = vst [vmem:[%s3 + $0x198] sm:$0xff] %v781
  %857 = vst [vmem:[%s3 + $0x1a0] sm:$0xff] %v782
  %858 = vst [vmem:[%s3 + $0x1a8] sm:$0xff] %v783
  %859 = vst [vmem:[%s3 + $0x1b0] sm:$0xff] %v784
  %860 = vst [vmem:[%s3 + $0x1b8] sm:$0xff] %v785
  %861 = vst [vmem:[%s3 + $0x1c0] sm:$0xff] %v786
  %862 = vst [vmem:[%s3 + $0x1c8] sm:$0xff] %v787
  %863 = vst [vmem:[%s3 + $0x1d0] sm:$0xff] %v788
  %864 = vst [vmem:[%s3 + $0x1d8] sm:$0xff] %v789
  %865 = vst [vmem:[%s3 + $0x1e0] sm:$0xff] %v790
  %866 = vst [vmem:[%s3 + $0x1e8] sm:$0xff] %v791
  %867 = vst [vmem:[%s3 + $0x1f0] sm:$0xff] %v792
  %868 = vst [vmem:[%s3 + $0x1f8] sm:$0xff] %v793
  %869 = vst [vmem:[%s3 + $0x200] sm:$0xff] %v794
  %870 = vst [vmem:[%s3 + $0x208] sm:$0xff] %v795
  %871 = vst [vmem:[%s3 + $0x210] sm:$0xff] %v796
  %872 = vst [vmem:[%s3 + $0x218] sm:$0xff] %v797
  %873 = vst [vmem:[%s3 + $0x220] sm:$0xff] %v798
  %874 = vst [vmem:[%s3 + $0x228] sm:$0xff] %v799
  %875 = vst [vmem:[%s3 + $0x230] sm:$0xff] %v800
  %876 = vst [vmem:[%s3 + $0x238] sm:$0xff] %v801
  %877 = vst [vmem:[%s3 + $0x240] sm:$0xf] %v802
  %878 = vst [vmem:[%s3 + $0x248] sm:$0xf] %v803
  %879 = vst [vmem:[%s3 + $0x250] sm:$0xf] %v804
  // Predicated region
  $region14: #{layernorm_pallas.1} parent=0 // pred_check
    _
  $region15: #{layernorm_pallas.1} parent=0 // pred_check_branch
    %881 = sbr.rel (0) target = $region17
  $region16: #{layernorm_pallas.1} parent=0 // pred_region
    _
  $region17: #{layernorm_pallas.1} parent=0 // pred_fallthru
    _
  // Predicated region
  $region18: #{layernorm_pallas.1} parent=0 // pred_check
    _
  $region19: #{layernorm_pallas.1} parent=0 // pred_check_branch
    %883 = sbr.rel (0) target = $region21
  $region20: #{layernorm_pallas.1} parent=0 // pred_region
    _
  $region21: #{layernorm_pallas.1} parent=0 // pred_fallthru
    _

</llo_original>
